<compile_context>
chip_gen: v6e
topology: v6e:2x2x1
jax: 0.10.0
libtpu: 0.0.40
codegen_flags: <defaults>
</compile_context>

<pallas_src>
import functools

import jax
import jax.numpy as jnp
from jax.experimental import pallas as pl
from jax.experimental.pallas import tpu as pltpu


def gaussian_kernel(x_ref, w_ref, b_ref, noise_ref, out_ref, *, z_dim):
    x = x_ref[...]                                              # (TB, in_dim)

    # One fused matmul for both heads: (TB, in_dim) @ (in_dim, 2*z_dim).
    pre = jnp.dot(x, w_ref[...], preferred_element_type=jnp.float32) + b_ref[...]

    mu = pre[:, :z_dim]                                         # mu pre-activation
    vpre = pre[:, z_dim:]                                       # var pre-activation

    # softplus, numerically stable form (== jax.nn.softplus).
    var = jnp.maximum(vpre, 0.0) + jnp.log1p(jnp.exp(-jnp.abs(vpre)))

    # Reparameterize: z = mu + noise * sqrt(var + 1e-10).
    std = jnp.sqrt(var + 1e-10)
    z = mu + noise_ref[...] * std

    # Single lane-denser store: [mu | var | z] -> (TB, 3*z_dim).
    out_ref[...] = jnp.concatenate([mu, var, z], axis=-1)


def gaussian_forward(x, w_mu, b_mu, w_var, b_var, noise, *, tb=512):
    B, in_dim = x.shape
    z_dim = w_mu.shape[1]

    # Fuse weights / biases for a single MXU matmul in the kernel.
    w = jnp.concatenate([w_mu, w_var], axis=1)                  # (in_dim, 2*z_dim)
    b = jnp.concatenate([b_mu, b_var]).reshape(1, 2 * z_dim)    # (1, 2*z_dim)

    # Batch tiling: TB rows per grid step (multiple of 8 sublanes when tiled;
    # equal to the full batch when B is small).
    TB = B if B <= tb else tb
    Bp = pl.cdiv(B, TB) * TB
    if Bp != B:
        pad = Bp - B
        x = jnp.pad(x, ((0, pad), (0, 0)))
        noise = jnp.pad(noise, ((0, pad), (0, 0)))
    grid = (Bp // TB,)

    f32_bytes = 4
    cost = pl.CostEstimate(
        flops=2 * Bp * in_dim * (2 * z_dim) + 8 * Bp * z_dim,
        transcendentals=2 * Bp * z_dim,          # exp/log1p + sqrt per element
        bytes_accessed=f32_bytes * (
            Bp * in_dim                          # x
            + in_dim * 2 * z_dim + 2 * z_dim     # fused weights + biases
            + Bp * z_dim                         # noise
            + Bp * 3 * z_dim                     # stacked output
        ),
    )

    out = pl.pallas_call(
        functools.partial(gaussian_kernel, z_dim=z_dim),
        grid=grid,
        in_specs=[
            pl.BlockSpec((TB, in_dim), lambda i: (i, 0)),        # x tile
            pl.BlockSpec((in_dim, 2 * z_dim), lambda i: (0, 0)), # fused W (resident)
            pl.BlockSpec((1, 2 * z_dim), lambda i: (0, 0)),      # fused b (resident)
            pl.BlockSpec((TB, z_dim), lambda i: (i, 0)),         # noise tile
        ],
        out_specs=pl.BlockSpec((TB, 3 * z_dim), lambda i: (i, 0)),
        out_shape=jax.ShapeDtypeStruct((Bp, 3 * z_dim), jnp.float32),
        compiler_params=pltpu.CompilerParams(
            dimension_semantics=("parallel",),
        ),
        cost_estimate=cost,
    )(x, w, b, noise)

    mu = out[:B, :z_dim]
    var = out[:B, z_dim:2 * z_dim]
    z = out[:B, 2 * z_dim:]
    return mu, var, z


def reference_forward(x, w_mu, b_mu, w_var, b_var, noise):
    mu = x @ w_mu + b_mu
    var = jax.nn.softplus(x @ w_var + b_var)
    z = mu + noise * jnp.sqrt(var + 1e-10)
    return mu, var, z


if __name__ == "__main__":
    B, in_dim, z_dim = 8, 32, 16

    key = jax.random.PRNGKey(0)
    kx, kwm, kbm, kwv, kbv, kn = jax.random.split(key, 6)

    # Deterministic init mimicking nn.Linear default: U(-1/sqrt(in_dim), 1/sqrt(in_dim))
    bound = 1.0 / (in_dim ** 0.5)
    x = jax.random.normal(kx, (B, in_dim), dtype=jnp.float32)
    w_mu = jax.random.uniform(kwm, (in_dim, z_dim), jnp.float32, -bound, bound)
    b_mu = jax.random.uniform(kbm, (z_dim,), jnp.float32, -bound, bound)
    w_var = jax.random.uniform(kwv, (in_dim, z_dim), jnp.float32, -bound, bound)
    b_var = jax.random.uniform(kbv, (z_dim,), jnp.float32, -bound, bound)
    noise = jax.random.normal(kn, (B, z_dim), dtype=jnp.float32)

    mu, var, z = gaussian_forward(x, w_mu, b_mu, w_var, b_var, noise)
    jax.block_until_ready((mu, var, z))

    # Correctness check vs. pure-JAX reference.
    mu_r, var_r, z_r = reference_forward(x, w_mu, b_mu, w_var, b_var, noise)
    assert jnp.allclose(mu, mu_r, atol=1e-5), "mu mismatch"
    assert jnp.allclose(var, var_r, atol=1e-5), "var mismatch"
    assert jnp.allclose(z, z_r, atol=1e-5), "z mismatch"

    # Sanity-check the tiled path too (B large enough to exercise the grid).
    B2 = 1040  # forces TB=512, grid=(3,), with padding
    k2 = jax.random.split(key, 2)[1]
    x2 = jax.random.normal(k2, (B2, in_dim), dtype=jnp.float32)
    n2 = jax.random.normal(jax.random.fold_in(k2, 1), (B2, z_dim), dtype=jnp.float32)
    mu2, var2, z2 = gaussian_forward(x2, w_mu, b_mu, w_var, b_var, n2)
    jax.block_until_ready((mu2, var2, z2))
    mu2_r, var2_r, z2_r = reference_forward(x2, w_mu, b_mu, w_var, b_var, n2)
    assert jnp.allclose(mu2, mu2_r, atol=1e-5), "tiled mu mismatch"
    assert jnp.allclose(var2, var2_r, atol=1e-5), "tiled var mismatch"
    assert jnp.allclose(z2, z2_r, atol=1e-5), "tiled z mismatch"

    print("KERNEL_OK")
</pallas_src>

<mosaic_0001>
module attributes {stable_mosaic.version = 11 : i64} {
  func.func @gaussian_kernel(%arg0: i32, %arg1: memref<8x32xf32, #tpu.memory_space<vmem>>, %arg2: memref<32x32xf32, #tpu.memory_space<vmem>>, %arg3: memref<1x32xf32, #tpu.memory_space<vmem>>, %arg4: memref<8x16xf32, #tpu.memory_space<vmem>>, %arg5: memref<8x48xf32, #tpu.memory_space<vmem>>) attributes {dimension_semantics = [#tpu.dimension_semantics<parallel>], iteration_bounds = array<i64: 1>, scalar_prefetch = 0 : i64, scratch_operands = 0 : i64, tpu.core_type = #tpu.core_type<tc>, window_params = [{transform_indices = @transform_0, window_bounds = array<i64: 8, 32>}, {pipeline_mode = #tpu.pipeline_mode<synchronous>, transform_indices = @transform_1, window_bounds = array<i64: 32, 32>}, {pipeline_mode = #tpu.pipeline_mode<synchronous>, transform_indices = @transform_2, window_bounds = array<i64: 1, 32>}, {transform_indices = @transform_3, window_bounds = array<i64: 8, 16>}, {transform_indices = @transform_4, window_bounds = array<i64: 8, 48>}]} {
    %c0 = arith.constant 0 : index
    %c0_0 = arith.constant 0 : index
    %0 = vector.load %arg1[%c0, %c0_0] : memref<8x32xf32, #tpu.memory_space<vmem>>, vector<8x32xf32>
    %c0_1 = arith.constant 0 : index
    %c0_2 = arith.constant 0 : index
    %1 = vector.load %arg2[%c0_1, %c0_2] : memref<32x32xf32, #tpu.memory_space<vmem>>, vector<32x32xf32>
    %cst = arith.constant dense<0.000000e+00> : vector<8x32xf32>
    %2 = tpu.matmul %0, %1, %cst {dimension_numbers = #tpu.dot_dimension_numbers<[1], [0], [0], [1], [0, 0, 1, 1], [], []>} : vector<8x32xf32>, vector<32x32xf32>, vector<8x32xf32> -> vector<8x32xf32>
    %c0_3 = arith.constant 0 : index
    %c0_4 = arith.constant 0 : index
    %3 = vector.load %arg3[%c0_3, %c0_4] : memref<1x32xf32, #tpu.memory_space<vmem>>, vector<1x32xf32>
    %4 = vector.broadcast %3 : vector<1x32xf32> to vector<8x32xf32>
    %5 = arith.addf %2, %4 : vector<8x32xf32>
    %6 = vector.extract_strided_slice %5 {offsets = [0, 0], sizes = [8, 16], strides = [1, 1]} : vector<8x32xf32> to vector<8x16xf32>
    %7 = vector.extract_strided_slice %5 {offsets = [0, 16], sizes = [8, 16], strides = [1, 1]} : vector<8x32xf32> to vector<8x16xf32>
    %cst_5 = arith.constant 0.000000e+00 : f32
    %8 = vector.broadcast %cst_5 : f32 to vector<8x16xf32>
    %9 = arith.maximumf %7, %8 : vector<8x16xf32>
    %10 = math.absf %7 : vector<8x16xf32>
    %cst_6 = arith.constant 0.000000e+00 : f32
    %11 = vector.broadcast %cst_6 : f32 to vector<8x16xf32>
    %12 = arith.subf %11, %10 : vector<8x16xf32>
    %13 = math.exp %12 : vector<8x16xf32>
    %14 = math.log1p %13 : vector<8x16xf32>
    %15 = arith.addf %9, %14 : vector<8x16xf32>
    %cst_7 = arith.constant 1.000000e-10 : f32
    %16 = vector.broadcast %cst_7 : f32 to vector<8x16xf32>
    %17 = arith.addf %15, %16 : vector<8x16xf32>
    %18 = math.sqrt %17 : vector<8x16xf32>
    %c0_8 = arith.constant 0 : index
    %c0_9 = arith.constant 0 : index
    %19 = vector.load %arg4[%c0_8, %c0_9] : memref<8x16xf32, #tpu.memory_space<vmem>>, vector<8x16xf32>
    %20 = arith.mulf %19, %18 : vector<8x16xf32>
    %21 = arith.addf %6, %20 : vector<8x16xf32>
    %22 = tpu.concatenate %6, %15, %21 in 1 : vector<8x16xf32>, vector<8x16xf32>, vector<8x16xf32> -> vector<8x48xf32>
    %c0_10 = arith.constant 0 : index
    %c0_11 = arith.constant 0 : index
    %23 = vector.load %arg5[%c0_10, %c0_11] : memref<8x48xf32, #tpu.memory_space<vmem>>, vector<8x48xf32>
    tpu.vector_store %arg5[%c0_10, %c0_11], %22 {strides = array<i32>} : memref<8x48xf32, #tpu.memory_space<vmem>>, vector<8x48xf32>,
    return
  }
  func.func @transform_0(%arg0: i32) -> (i32, i32) {
    %c0_i32 = arith.constant 0 : i32
    %c0_i32_0 = arith.constant 0 : i32
    return %arg0, %c0_i32 : i32, i32
  }
  func.func @transform_1(%arg0: i32) -> (i32, i32) {
    %c0_i32 = arith.constant 0 : i32
    %c0_i32_0 = arith.constant 0 : i32
    %c0_i32_1 = arith.constant 0 : i32
    return %c0_i32, %c0_i32_0 : i32, i32
  }
  func.func @transform_2(%arg0: i32) -> (i32, i32) {
    %c0_i32 = arith.constant 0 : i32
    %c0_i32_0 = arith.constant 0 : i32
    %c0_i32_1 = arith.constant 0 : i32
    return %c0_i32, %c0_i32_0 : i32, i32
  }
  func.func @transform_3(%arg0: i32) -> (i32, i32) {
    %c0_i32 = arith.constant 0 : i32
    %c0_i32_0 = arith.constant 0 : i32
    return %arg0, %c0_i32 : i32, i32
  }
  func.func @transform_4(%arg0: i32) -> (i32, i32) {
    %c0_i32 = arith.constant 0 : i32
    %c0_i32_0 = arith.constant 0 : i32
    return %arg0, %c0_i32 : i32, i32
  }
}

</mosaic_0001>

<llo_original>
// kernel: tpu_custom_call.1
$region0: #{tpu_custom_call.1}
  #allocation0 [shape = 'u32[]', space=smem, size = 0x4, offset = 0x4, fixed_abs, tag = 'smem constant byte address 0x4 - core index']
  #allocation1 [shape = 'u32[144,128]{1,0:T(1,128)}', space=vmem, size = 0x12000, scoped, tag = 'internal scratch']
  %s0 = inlined_call_operand.hbm [shape: f32[8,32], index: 0, kind: input, shape index: {}]
  %s1 = inlined_call_operand.hbm [shape: f32[32,32], index: 1, kind: input, shape index: {}]
  %s2 = inlined_call_operand.vmem [shape: f32[1,32], index: 2, kind: input, shape index: {}]
  %s3 = inlined_call_operand.hbm [shape: f32[8,16], index: 3, kind: input, shape index: {}]
  %s4 = inlined_call_operand.hbm [shape: f32[8,48], index: 4, kind: output, shape index: {}]
  %s5 = sld [smem:[#allocation0]]
  $region38: #{tpu_custom_call.1} parent=0
    _
  %s7 = ssub.s32 1, %s5
  %s8 = scalar_select 0, %s7, %s5
  $region1: #{tpu_custom_call.1} parent=0
    #allocation2 [shape = 'u8[4096]{0}', space=vmem, size = 0x1000, scoped, tag = 'input window, operand 0, single buffered']
    #allocation3 [shape = 's32[1]{0}', space=sflag, size = 0x4, scoped, tag = 'scoped memory for tpu_custom_call.1']
    #allocation4 [shape = 's32[1]{0}', space=sflag, size = 0x4, scoped, tag = 'scoped memory for tpu_custom_call.1']
    #allocation5 [shape = 'u8[16384]{0}', space=vmem, size = 0x4000, scoped, tag = 'input window, operand 1, single buffered']
    #allocation6 [shape = 's32[1]{0}', space=sflag, size = 0x4, scoped, tag = 'scoped memory for tpu_custom_call.1']
    #allocation7 [shape = 'u8[4096]{0}', space=vmem, size = 0x1000, scoped, tag = 'input window, operand 3, single buffered']
    #allocation8 [shape = 'u8[4096]{0}', space=vmem, size = 0x1000, scoped, tag = 'output window, operand 0, single buffered']
    %9 = vsyncpa [#allocation3], 0
    %10 = vsyncpa [#allocation6], 0
    %11 = vsyncpa [#allocation4], 0
    // Predicated region
    $region2: #{tpu_custom_call.1} parent=1 // pred_check
      _
    $region3: #{tpu_custom_call.1} parent=1 // pred_check_branch
      %13 = sbr.rel (0) target = $region5
    $region4: #{tpu_custom_call.1} parent=1 // pred_region
      %s15 = ssub.s32 128, 128
      %16 = vsyncadd [#allocation3], %s15
      %s18 = sshll.u32 [#allocation2], 4
      %s19 = int_to_ptr.vmem [resolvable:$true] %s18
      %21 = dma.hbm_to_vmem [thread:$0]  %s0, 128, %s19, [#allocation3]
    $region5: #{tpu_custom_call.1} parent=1 // pred_fallthru
      _
    // Predicated region
    $region6: #{tpu_custom_call.1} parent=1 // pred_check
      _
    $region7: #{tpu_custom_call.1} parent=1 // pred_check_branch
      %23 = sbr.rel (0) target = $region9
    $region8: #{tpu_custom_call.1} parent=1 // pred_region
      %s25 = ssub.s32 512, 512
      %26 = vsyncadd [#allocation6], %s25
      %s27 = sshll.u32 [#allocation5], 4
      %s28 = int_to_ptr.vmem [resolvable:$true] %s27
      %33 = dma.hbm_to_vmem [thread:$0]  %s1, 512, %s28, [#allocation6], 128, 128, 8
    $region9: #{tpu_custom_call.1} parent=1 // pred_fallthru
      _
    // Predicated region
    $region10: #{tpu_custom_call.1} parent=1 // pred_check
      _
    $region11: #{tpu_custom_call.1} parent=1 // pred_check_branch
      %35 = sbr.rel (0) target = $region13
    $region12: #{tpu_custom_call.1} parent=1 // pred_region
      _
    $region13: #{tpu_custom_call.1} parent=1 // pred_fallthru
      _
    // Predicated region
    $region14: #{tpu_custom_call.1} parent=1 // pred_check
      _
    $region15: #{tpu_custom_call.1} parent=1 // pred_check_branch
      %37 = sbr.rel (0) target = $region17
    $region16: #{tpu_custom_call.1} parent=1 // pred_region
      %s39 = ssub.s32 128, 128
      %40 = vsyncadd [#allocation6], %s39
      %s42 = sshll.u32 [#allocation7], 4
      %s43 = int_to_ptr.vmem [resolvable:$true] %s42
      %45 = dma.hbm_to_vmem [thread:$0]  %s3, 128, %s43, [#allocation6]
    $region17: #{tpu_custom_call.1} parent=1 // pred_fallthru
      _
    // Predicated region
    $region18: #{tpu_custom_call.1} parent=1 // pred_check
      _
    $region19: #{tpu_custom_call.1} parent=1 // pred_check_branch
      %47 = sbr.rel (0) target = $region21
    $region20: #{tpu_custom_call.1} parent=1 // pred_region
      %48 = dma.done [#allocation3], 128
    $region21: #{tpu_custom_call.1} parent=1 // pred_fallthru
      _
    // Predicated region
    $region22: #{tpu_custom_call.1} parent=1 // pred_check
      _
    $region23: #{tpu_custom_call.1} parent=1 // pred_check_branch
      %50 = sbr.rel (0) target = $region25
    $region24: #{tpu_custom_call.1} parent=1 // pred_region
      %51 = dma.done [#allocation6], 512
    $region25: #{tpu_custom_call.1} parent=1 // pred_fallthru
      _
    // Predicated region
    $region26: #{tpu_custom_call.1} parent=1 // pred_check
      _
    $region27: #{tpu_custom_call.1} parent=1 // pred_check_branch
      %53 = sbr.rel (0) target = $region29
    $region28: #{tpu_custom_call.1} parent=1 // pred_region
      %54 = dma.done [#allocation6], 128
    $region29: #{tpu_custom_call.1} parent=1 // pred_fallthru
      _
    %v55 = vld [vmem:[#allocation2] sm:$0xff]
    %v56 = vld [vmem:[#allocation5] sm:$0xff]
    %v57 = vld [vmem:[#allocation5 + $0x8] sm:$0xff]
    %v58 = vld [vmem:[#allocation5 + $0x10] sm:$0xff]
    %v59 = vld [vmem:[#allocation5 + $0x18] sm:$0xff]
    %v60 = vld [vmem:[%s2] sm:$0x1]
    %v62 = vlaneseq
    %v63 = vshrl.u32 %v62, 7
    %v64 = vsub.s32 0, %v63
    %v65 = vrot.slane %v60, %v64
    %vm67 = vcmask 261120
    %v69 = vsel %vm67, %v55, 0
    %71 = vmatprep.subr.mxu0 0.0
    %72 = vmatpush1.msra.mxu0 0.0
    %73 = vmatprep.subr.mxu0 0.0
    %74 = vmatpush1.msra.mxu0 0.0
    %75 = vmatprep.subr.mxu0 0.0
    %76 = vmatpush1.msra.mxu0 0.0
    %77 = vmatprep.subr.mxu0 0.0
    %78 = vmatpush1.msra.mxu0 0.0
    %79 = vmatprep.subr.mxu0 0.0
    %80 = vmatpush1.msra.mxu0 0.0
    %81 = vmatprep.subr.mxu0 0.0
    %82 = vmatpush1.msra.mxu0 0.0
    %83 = vmatprep.subr.mxu0 0.0
    %84 = vmatpush1.msra.mxu0 0.0
    %85 = vmatprep.subr.mxu0 0.0
    %86 = vmatpush1.msra.mxu0 0.0
    %87 = vmatprep.subr.mxu0 0.0
    %88 = vmatpush1.msra.mxu0 0.0
    %89 = vmatprep.subr.mxu0 0.0
    %90 = vmatpush1.msra.mxu0 0.0
    %91 = vmatprep.subr.mxu0 0.0
    %92 = vmatpush1.msra.mxu0 0.0
    %93 = vmatprep.subr.mxu0 0.0
    %94 = vmatpush1.msra.mxu0 0.0
    %95 = vmatprep.subr.mxu0 0.0
    %96 = vmatpush1.msra.mxu0 %v59
    %97 = vmatprep.subr.mxu0 0.0
    %98 = vmatpush1.msra.mxu0 %v58
    %99 = vmatprep.subr.mxu0 0.0
    %100 = vmatpush1.msra.mxu0 %v57
    %101 = vmatprep.subr.mxu0 0.0
    %102 = vmatpush1.msra.mxu0 %v56
    %103 = vmatprep.subr.mxu0 0.0
    %104 = vmatpush2.msra.mxu0 0.0
    %105 = vmatprep.subr.mxu0 0.0
    %106 = vmatpush2.msra.mxu0 0.0
    %107 = vmatprep.subr.mxu0 0.0
    %108 = vmatpush2.msra.mxu0 0.0
    %109 = vmatprep.subr.mxu0 0.0
    %110 = vmatpush2.msra.mxu0 0.0
    %111 = vmatprep.subr.mxu0 0.0
    %112 = vmatpush2.msra.mxu0 0.0
    %113 = vmatprep.subr.mxu0 0.0
    %114 = vmatpush2.msra.mxu0 0.0
    %115 = vmatprep.subr.mxu0 0.0
    %116 = vmatpush2.msra.mxu0 0.0
    %117 = vmatprep.subr.mxu0 0.0
    %118 = vmatpush2.msra.mxu0 0.0
    %119 = vmatprep.subr.mxu0 0.0
    %120 = vmatpush2.msra.mxu0 0.0
    %121 = vmatprep.subr.mxu0 0.0
    %122 = vmatpush2.msra.mxu0 0.0
    %123 = vmatprep.subr.mxu0 0.0
    %124 = vmatpush2.msra.mxu0 0.0
    %125 = vmatprep.subr.mxu0 0.0
    %126 = vmatpush2.msra.mxu0 0.0
    %127 = vmatprep.subr.mxu0 0.0
    %128 = vmatpush2.msra.mxu0 0.0
    %129 = vmatprep.subr.mxu0 0.0
    %130 = vmatpush2.msra.mxu0 0.0
    %131 = vmatprep.subr.mxu0 0.0
    %132 = vmatpush2.msra.mxu0 0.0
    %133 = vmatprep.subr.mxu0 0.0
    %134 = vmatpush2.msra.mxu0 0.0
    %135 = vmatprep.mubr.f32.mxu0 0.0
    %136 = vmatmul.mubr.f32.gmra.mxu0 %v69
    %v137 = vpop.f32.mrf.mxu0
    %v138 = vadd.f32 %v65, %v137
    %v139 = vpop.f32.mrf.mxu0
    %140 = vdwg.mxu0
    %v141 = vmax.f32 %v138, 0.0
    %v142 = vand.u32 2147483647, %v138
    %v143 = vsub.f32 0.0, %v142
    %v144 = vmul.f32 %v143, 1.442695
    %v145 = vpow.pop %v144
    %v146 = vadd.f32 %v145, 1.0
    %v147 = vlog2.pop %v146
    %v148 = vmul.f32 %v147, 0.6931472
    %v149 = vmul.f32 -0.5, %v145
    %v150 = vadd.f32 %v149, 1.0
    %v151 = vmul.f32 %v150, %v145
    %v152 = vand.u32 2147483647, %v145
    %vm153 = vcmp.lt.f32.partialorder %v152, 0.0004427343
    %v154 = vsel %vm153, %v151, %v148
    %v155 = vadd.f32 %v141, %v154
    %v156 = vadd.f32 %v155, 1e-10
    %v157 = vrsqrt.pop %v156
    %v158 = vmul.f32 %v156, %v157
    %vm159 = vcmp.eq.f32.partialorder %v156, inf
    %v160 = vsel %vm159, %v156, %v158
    %vm161 = vcmp.eq.f32.partialorder %v156, 0.0
    %v162 = vand.u32 %v156, 2147483648
    %v163 = vsel %vm161, %v162, %v160
    %v164 = vld [vmem:[#allocation7] sm:$0xff]
    %166 = vrot.lane.b32.xlu0 %v163, 112
    %v167 = vpop.permute.xlu0 %166
    %v169 = vmul.f32 %v164, %v167
    %v170 = vadd.f32 %v138, %v169
    %172 = vrot.lane.b32.xlu0 %v170, 32
    %v173 = vpop.permute.xlu0 %172
    %vm175 = vcmask 130048
    %v176 = vsel %vm175, %v138, %v155
    %v177 = vsel %vm67, %v176, %v173
    %vm178 = vcmask 392192
    %179 = vst.msk [vmem:[#allocation8] sm:$0xff] %vm178, %v177
    // Predicated region
    $region30: #{tpu_custom_call.1} parent=1 // pred_check
      _
    $region31: #{tpu_custom_call.1} parent=1 // pred_check_branch
      %181 = sbr.rel (0) target = $region33
    $region32: #{tpu_custom_call.1} parent=1 // pred_region
      %s183 = ssub.s32 128, 128
      %184 = vsyncadd [#allocation4], %s183
      %s186 = sshll.u32 [#allocation8], 4
      %s187 = int_to_ptr.vmem [resolvable:$true] %s186
      %189 = dma.vmem_to_hbm [thread:$0]  %s187, 128, %s4, [#allocation4]
    $region33: #{tpu_custom_call.1} parent=1 // pred_fallthru
      _
    // Predicated region
    $region34: #{tpu_custom_call.1} parent=1 // pred_check
      _
    $region35: #{tpu_custom_call.1} parent=1 // pred_check_branch
      %191 = sbr.rel (0) target = $region37
    $region36: #{tpu_custom_call.1} parent=1 // pred_region
      %192 = dma.done [#allocation4], 128
    $region37: #{tpu_custom_call.1} parent=1 // pred_fallthru
      _
    %193 = vsyncpa [#allocation3], 1
    %194 = vsyncpa [#allocation6], 1
    %195 = vsyncpa [#allocation4], 1

</llo_original>
